<compile_context>
chip_gen: v6e
topology: v6e:2x2x1
jax: 0.10.0
libtpu: 0.0.40
codegen_flags: <defaults>
</compile_context>

<pallas_src>
import functools

import jax
import jax.numpy as jnp
import numpy as np
from jax import lax
from jax.experimental import pallas as pl
from jax.experimental.pallas import tpu as pltpu


# ----------------------------------------------------------------------------
# Kernels
# ----------------------------------------------------------------------------
def _bn3d_kernel(x_ref, gamma_ref, beta_ref, o_ref, *, eps, inv_count):
    """One channel-block: x_ref (N, c_blk, L); gamma/beta (c_blk, 1)."""
    x = x_ref[...].astype(jnp.float32)                 # (N, c_blk, L)
    # Fused single-pass statistics.
    xs = jnp.sum(x, axis=0)                            # (c_blk, L)   VPU adds
    xss = jnp.sum(x * x, axis=0)                       # (c_blk, L)
    s = jnp.sum(xs, axis=1, keepdims=True)             # (c_blk, 1)   XLU lane reduce
    ss = jnp.sum(xss, axis=1, keepdims=True)           # (c_blk, 1)
    mean = s * inv_count
    var = jnp.maximum(ss * inv_count - mean * mean, 0.0)   # biased variance
    inv_std = lax.rsqrt(var + eps)                     # EUP
    scale = gamma_ref[...] * inv_std                   # (c_blk, 1)
    shift = beta_ref[...] - mean * scale               # (c_blk, 1)
    o_ref[...] = (x * scale[None] + shift[None]).astype(o_ref.dtype)


def _bn2d_kernel(x_ref, gamma_ref, beta_ref, o_ref, *, eps, inv_count):
    """2-D path: x_ref (N, c_blk) with channels lane-dense; gamma/beta (1, c_blk)."""
    x = x_ref[...].astype(jnp.float32)                 # (N, c_blk)
    s = jnp.sum(x, axis=0, keepdims=True)              # (1, c_blk)
    ss = jnp.sum(x * x, axis=0, keepdims=True)
    mean = s * inv_count
    var = jnp.maximum(ss * inv_count - mean * mean, 0.0)
    inv_std = lax.rsqrt(var + eps)
    scale = gamma_ref[...] * inv_std
    shift = beta_ref[...] - mean * scale
    o_ref[...] = (x * scale + shift).astype(o_ref.dtype)


# ----------------------------------------------------------------------------
# Sizing helpers (generation-aware)
# ----------------------------------------------------------------------------
def _vmem_limit_and_budget():
    """(vmem_limit_bytes for CompilerParams, per-tile footprint budget)."""
    cap = 64 * 1024 * 1024
    try:
        info = pltpu.get_tpu_info()
        cap = int(getattr(info, "vmem_capacity_bytes", cap))
    except Exception:
        pass
    vmem_limit = int(min(cap * 3 // 4, 96 * 1024 * 1024))
    budget = vmem_limit // 2            # leave headroom for temporaries/spills
    return vmem_limit, budget


def _round_up(v, m):
    return ((v + m - 1) // m) * m


def _choose_c_block_3d(c_total8, elems_per_channel, in_bytes, out_bytes,
                       budget, min_steps=4):
    """Largest multiple-of-8 channel block under budget; capped so the grid has
    at least `min_steps` steps when C is large enough (pipelining + v7x TCs)."""
    per_row = elems_per_channel * (2 * in_bytes + 2 * out_bytes + 8)  # dbl-buf + f32 temps
    c_blk = c_total8
    while c_blk > 8 and c_blk * per_row > budget:
        c_blk //= 2
    c_blk = max(8, (c_blk // 8) * 8)
    if c_total8 >= min_steps * 8:
        cap_blk = max(8, ((c_total8 // min_steps) // 8) * 8)
        c_blk = min(c_blk, cap_blk)
    return c_blk


def _choose_c_block_2d(c_total128, n_rows, in_bytes, out_bytes,
                       budget, min_steps=2):
    per_col = n_rows * (2 * in_bytes + 2 * out_bytes + 8)
    c_blk = c_total128
    while c_blk > 128 and c_blk * per_col > budget:
        c_blk //= 2
    c_blk = max(128, (c_blk // 128) * 128)
    if c_total128 >= min_steps * 128:
        cap_blk = max(128, ((c_total128 // min_steps) // 128) * 128)
        c_blk = min(c_blk, cap_blk)
    return c_blk


# ----------------------------------------------------------------------------
# Wrappers
# ----------------------------------------------------------------------------
def _bn_forward_3d(x, gamma, beta, eps):
    N, C, L = x.shape
    out_dtype = x.dtype
    vmem_limit, budget = _vmem_limit_and_budget()

    c8 = _round_up(C, 8)
    c_blk = _choose_c_block_3d(c8, N * L, x.dtype.itemsize, out_dtype.itemsize, budget)
    c_pad = _round_up(C, c_blk)

    x_p = x if c_pad == C else jnp.pad(x, ((0, 0), (0, c_pad - C), (0, 0)))
    gamma_p = jnp.pad(gamma.astype(jnp.float32), (0, c_pad - C),
                      constant_values=1.0).reshape(c_pad, 1)
    beta_p = jnp.pad(beta.astype(jnp.float32), (0, c_pad - C)).reshape(c_pad, 1)

    kernel = functools.partial(_bn3d_kernel, eps=float(eps),
                               inv_count=1.0 / float(N * L))

    y = pl.pallas_call(
        kernel,
        out_shape=jax.ShapeDtypeStruct((N, c_pad, L), out_dtype),
        grid_spec=pltpu.PrefetchScalarGridSpec(
            num_scalar_prefetch=0,
            grid=(c_pad // c_blk,),
            in_specs=[
                pl.BlockSpec((N, c_blk, L), lambda i: (0, i, 0)),
                pl.BlockSpec((c_blk, 1), lambda i: (i, 0)),
                pl.BlockSpec((c_blk, 1), lambda i: (i, 0)),
            ],
            out_specs=pl.BlockSpec((N, c_blk, L), lambda i: (0, i, 0)),
        ),
        compiler_params=pltpu.CompilerParams(
            dimension_semantics=("parallel",),   # channel blocks are independent
            vmem_limit_bytes=vmem_limit,
        ),
    )(x_p, gamma_p, beta_p)

    return y if c_pad == C else y[:, :C, :]


def _bn_forward_2d(x, gamma, beta, eps):
    N, C = x.shape
    out_dtype = x.dtype
    vmem_limit, budget = _vmem_limit_and_budget()

    c128 = _round_up(C, 128)
    c_blk = _choose_c_block_2d(c128, N, x.dtype.itemsize, out_dtype.itemsize, budget)
    c_pad = _round_up(C, c_blk)

    x_p = x if c_pad == C else jnp.pad(x, ((0, 0), (0, c_pad - C)))
    gamma_p = jnp.pad(gamma.astype(jnp.float32), (0, c_pad - C),
                      constant_values=1.0).reshape(1, c_pad)
    beta_p = jnp.pad(beta.astype(jnp.float32), (0, c_pad - C)).reshape(1, c_pad)

    kernel = functools.partial(_bn2d_kernel, eps=float(eps), inv_count=1.0 / float(N))

    y = pl.pallas_call(
        kernel,
        out_shape=jax.ShapeDtypeStruct((N, c_pad), out_dtype),
        grid_spec=pltpu.PrefetchScalarGridSpec(
            num_scalar_prefetch=0,
            grid=(c_pad // c_blk,),
            in_specs=[
                pl.BlockSpec((N, c_blk), lambda i: (0, i)),
                pl.BlockSpec((1, c_blk), lambda i: (0, i)),
                pl.BlockSpec((1, c_blk), lambda i: (0, i)),
            ],
            out_specs=pl.BlockSpec((N, c_blk), lambda i: (0, i)),
        ),
        compiler_params=pltpu.CompilerParams(
            dimension_semantics=("parallel",),
            vmem_limit_bytes=vmem_limit,
        ),
    )(x_p, gamma_p, beta_p)

    return y if c_pad == C else y[:, :C]


def batchnorm1d_forward(x, gamma, beta, eps=1e-5):
    """Training-mode nn.BatchNorm1d forward. Accepts (N, C) or (N, C, L)."""
    if x.ndim == 3:
        return _bn_forward_3d(x, gamma, beta, eps)
    if x.ndim == 2:
        return _bn_forward_2d(x, gamma, beta, eps)
    raise ValueError(f"BatchNorm1d expects 2-D or 3-D input, got {x.ndim}-D")


# ----------------------------------------------------------------------------
# Pure-JAX reference (training-mode BatchNorm1d)
# ----------------------------------------------------------------------------
def batchnorm1d_ref(x, gamma, beta, eps=1e-5):
    x = x.astype(jnp.float32)
    if x.ndim == 2:
        axes, shape = (0,), (1, -1)
    else:
        axes, shape = (0, 2), (1, -1, 1)
    mean = jnp.mean(x, axis=axes, keepdims=True)
    var = jnp.mean((x - mean) ** 2, axis=axes, keepdims=True)     # biased
    return (x - mean) / jnp.sqrt(var + eps) * gamma.reshape(shape) + beta.reshape(shape)


# ----------------------------------------------------------------------------
if __name__ == "__main__":
    key = jax.random.PRNGKey(0)
    kx, kg, kb, k2 = jax.random.split(key, 4)

    # 3-D (N, C, L) case — natural layout, lane-dense L, grid of 4 channel blocks
    N, C, L = 4, 32, 128
    x3 = jax.random.normal(kx, (N, C, L), jnp.float32)
    gamma = 1.0 + 0.1 * jax.random.normal(kg, (C,), jnp.float32)
    beta = 0.1 * jax.random.normal(kb, (C,), jnp.float32)

    out3 = jax.block_until_ready(batchnorm1d_forward(x3, gamma, beta))
    assert out3.shape == (N, C, L), out3.shape
    ref3 = jax.block_until_ready(batchnorm1d_ref(x3, gamma, beta))
    np.testing.assert_allclose(np.asarray(out3), np.asarray(ref3),
                               rtol=1e-4, atol=1e-5)

    # 2-D (N, C) case — channels lane-dense
    x2 = jax.random.normal(k2, (16, C), jnp.float32)
    out2 = jax.block_until_ready(batchnorm1d_forward(x2, gamma, beta))
    assert out2.shape == (16, C), out2.shape
    ref2 = jax.block_until_ready(batchnorm1d_ref(x2, gamma, beta))
    np.testing.assert_allclose(np.asarray(out2), np.asarray(ref2),
                               rtol=1e-4, atol=1e-5)

    print("KERNEL_OK")
</pallas_src>

<mosaic_0001>
module attributes {stable_mosaic.version = 11 : i64} {
  func.func @_bn3d_kernel(%arg0: i32, %arg1: memref<4x8x128xf32, #tpu.memory_space<vmem>>, %arg2: memref<8x1xf32, #tpu.memory_space<vmem>>, %arg3: memref<8x1xf32, #tpu.memory_space<vmem>>, %arg4: memref<4x8x128xf32, #tpu.memory_space<vmem>>) attributes {dimension_semantics = [#tpu.dimension_semantics<parallel>], iteration_bounds = array<i64: 4>, scalar_prefetch = 0 : i64, scratch_operands = 0 : i64, tpu.core_type = #tpu.core_type<tc>, window_params = [{transform_indices = @transform_0, window_bounds = array<i64: 4, 8, 128>}, {transform_indices = @transform_1, window_bounds = array<i64: 8, 1>}, {transform_indices = @transform_2, window_bounds = array<i64: 8, 1>}, {transform_indices = @transform_3, window_bounds = array<i64: 4, 8, 128>}]} {
    %c0 = arith.constant 0 : index
    %c0_0 = arith.constant 0 : index
    %c0_1 = arith.constant 0 : index
    %0 = vector.load %arg1[%c0, %c0_0, %c0_1] : memref<4x8x128xf32, #tpu.memory_space<vmem>>, vector<4x8x128xf32>
    %cst = arith.constant dense<0.000000e+00> : vector<8x128xf32>
    %1 = vector.multi_reduction <add>, %0, %cst [0] : vector<4x8x128xf32> to vector<8x128xf32>
    %2 = arith.mulf %0, %0 : vector<4x8x128xf32>
    %cst_2 = arith.constant dense<0.000000e+00> : vector<8x128xf32>
    %3 = vector.multi_reduction <add>, %2, %cst_2 [0] : vector<4x8x128xf32> to vector<8x128xf32>
    %cst_3 = arith.constant dense<0.000000e+00> : vector<8xf32>
    %4 = vector.multi_reduction <add>, %1, %cst_3 [1] : vector<8x128xf32> to vector<8xf32>
    %5 = vector.shape_cast %4 : vector<8xf32> to vector<8x1xf32>
    %cst_4 = arith.constant dense<0.000000e+00> : vector<8xf32>
    %6 = vector.multi_reduction <add>, %3, %cst_4 [1] : vector<8x128xf32> to vector<8xf32>
    %7 = vector.shape_cast %6 : vector<8xf32> to vector<8x1xf32>
    %cst_5 = arith.constant 0.001953125 : f32
    %8 = vector.broadcast %cst_5 : f32 to vector<8x1xf32>
    %9 = arith.mulf %5, %8 : vector<8x1xf32>
    %cst_6 = arith.constant 0.001953125 : f32
    %10 = vector.broadcast %cst_6 : f32 to vector<8x1xf32>
    %11 = arith.mulf %7, %10 : vector<8x1xf32>
    %12 = arith.mulf %9, %9 : vector<8x1xf32>
    %13 = arith.subf %11, %12 : vector<8x1xf32>
    %cst_7 = arith.constant 0.000000e+00 : f32
    %14 = vector.broadcast %cst_7 : f32 to vector<8x1xf32>
    %15 = arith.maximumf %13, %14 : vector<8x1xf32>
    %cst_8 = arith.constant 9.99999974E-6 : f32
    %16 = vector.broadcast %cst_8 : f32 to vector<8x1xf32>
    %17 = arith.addf %15, %16 : vector<8x1xf32>
    %18 = math.rsqrt %17 : vector<8x1xf32>
    %c0_9 = arith.constant 0 : index
    %c0_10 = arith.constant 0 : index
    %19 = vector.load %arg2[%c0_9, %c0_10] : memref<8x1xf32, #tpu.memory_space<vmem>>, vector<8x1xf32>
    %20 = arith.mulf %19, %18 : vector<8x1xf32>
    %c0_11 = arith.constant 0 : index
    %c0_12 = arith.constant 0 : index
    %21 = vector.load %arg3[%c0_11, %c0_12] : memref<8x1xf32, #tpu.memory_space<vmem>>, vector<8x1xf32>
    %22 = arith.mulf %9, %20 : vector<8x1xf32>
    %23 = arith.subf %21, %22 : vector<8x1xf32>
    %24 = vector.shape_cast %20 : vector<8x1xf32> to vector<1x8x1xf32>
    %25 = vector.broadcast %24 : vector<1x8x1xf32> to vector<4x8x128xf32>
    %26 = arith.mulf %0, %25 : vector<4x8x128xf32>
    %27 = vector.shape_cast %23 : vector<8x1xf32> to vector<1x8x1xf32>
    %28 = vector.broadcast %27 : vector<1x8x1xf32> to vector<4x8x128xf32>
    %29 = arith.addf %26, %28 : vector<4x8x128xf32>
    %c0_13 = arith.constant 0 : index
    %c0_14 = arith.constant 0 : index
    %c0_15 = arith.constant 0 : index
    %30 = vector.load %arg4[%c0_13, %c0_14, %c0_15] : memref<4x8x128xf32, #tpu.memory_space<vmem>>, vector<4x8x128xf32>
    tpu.vector_store %arg4[%c0_13, %c0_14, %c0_15], %29 {strides = array<i32>} : memref<4x8x128xf32, #tpu.memory_space<vmem>>, vector<4x8x128xf32>,
    return
  }
  func.func @transform_0(%arg0: i32) -> (i32, i32, i32) {
    %c0_i32 = arith.constant 0 : i32
    %c0_i32_0 = arith.constant 0 : i32
    %c0_i32_1 = arith.constant 0 : i32
    return %c0_i32, %arg0, %c0_i32_0 : i32, i32, i32
  }
  func.func @transform_1(%arg0: i32) -> (i32, i32) {
    %c0_i32 = arith.constant 0 : i32
    %c0_i32_0 = arith.constant 0 : i32
    return %arg0, %c0_i32 : i32, i32
  }
  func.func @transform_2(%arg0: i32) -> (i32, i32) {
    %c0_i32 = arith.constant 0 : i32
    %c0_i32_0 = arith.constant 0 : i32
    return %arg0, %c0_i32 : i32, i32
  }
  func.func @transform_3(%arg0: i32) -> (i32, i32, i32) {
    %c0_i32 = arith.constant 0 : i32
    %c0_i32_0 = arith.constant 0 : i32
    %c0_i32_1 = arith.constant 0 : i32
    return %c0_i32, %arg0, %c0_i32_0 : i32, i32, i32
  }
}

</mosaic_0001>

<llo_original>
// kernel: tpu_custom_call.1
$region0: #{tpu_custom_call.1}
  #allocation0 [shape = 'u32[]', space=smem, size = 0x4, offset = 0x4, fixed_abs, tag = 'smem constant byte address 0x4 - core index']
  #allocation1 [shape = 'u32[144,128]{1,0:T(1,128)}', space=vmem, size = 0x12000, scoped, tag = 'internal scratch']
  %s0 = inlined_call_operand.hbm [shape: f32[4,32,128], index: 0, kind: input, shape index: {}]
  %s1 = inlined_call_operand.vmem [shape: f32[32,1], index: 1, kind: input, shape index: {}]
  %s2 = inlined_call_operand.vmem [shape: f32[32,1], index: 2, kind: input, shape index: {}]
  %s3 = inlined_call_operand.hbm [shape: f32[4,32,128], index: 3, kind: output, shape index: {}]
  %s4 = sld [smem:[#allocation0]]
  $region49: #{tpu_custom_call.1} parent=0
    _
  %s6 = ssub.s32 1, %s4
  %s7 = scalar_select 0, %s6, %s4
  $region1: #{tpu_custom_call.1} parent=0
    #allocation2 [shape = 'u8[32768]{0}', space=vmem, size = 0x8000, scoped, tag = 'input window, operand 0']
    #allocation3 [shape = 's32[2]{0}', space=sflag, size = 0x8, scoped, tag = 'scoped memory for tpu_custom_call.1']
    #allocation4 [shape = 's32[2]{0}', space=sflag, size = 0x8, scoped, tag = 'scoped memory for tpu_custom_call.1']
    #allocation5 [shape = 'u8[32768]{0}', space=vmem, size = 0x8000, scoped, tag = 'output window, operand 0']
    %8 = vsyncpa [#allocation3], 0
    %s9 = scalar_lea.sflag [#allocation3], 1
    %10 = vsyncpa %s9, 0
    %11 = vsyncpa [#allocation4], 0
    %s12 = scalar_lea.sflag [#allocation4], 1
    %13 = vsyncpa %s12, 0
    loop: start=0, step=1, limit=6
    $region2: #{tpu_custom_call.1} parent=1 // loop_pre_header
      _
    $region3: #{tpu_custom_call.1} parent=1 // loop_header
      %s15 = sphi 0, %s19
      %p16 = scmp.ge.s32.totalorder %s15, 6
      %s25 = sphi 0, %s27
      %s28 = sphi 0, %s25
      %s29 = sphi 0, %s28
      %s45 = sphi 0, %s29
      %s51 = sphi 0, %s53
      %s54 = sphi 0, %s51
      %s55 = sphi 0, %s54
      %s71 = sphi 0, %s55
      %s77 = sphi 0, %s79
      %s80 = sphi 0, %s77
      %s81 = sphi 0, %s80
      %s97 = sphi 0, %s81
      %s103 = sphi 0, %s105
      %s106 = sphi 0, %s103
      %s107 = sphi 0, %s106
      %s123 = sphi 0, %s107
    $region4: #{tpu_custom_call.1} parent=1 // loop_header_branch
      %18 = sbr.rel (%p16) target = $region8
    $region5: #{tpu_custom_call.1} parent=1 // loop_body
      %s20 = ssub.s32 %s15, 1
      %s21 = ssub.s32 %s15, 2
      %s22 = sadd.s32 %s15, 1
      %s23 = ssub.s32 %s15, %s22
      %p24 = scmp.eq.s32.totalorder %s23, 0
      %s26 = sadd.s32 %s25, 1
      %s27 = scalar_select %p24, %s25, %s26
      %p30 = pneg %p24
      %p31 = scmp.eq.s32.totalorder %s15, 3
      %p32 = por %p30, %p31
      %p33 = scmp.ne.s32.totalorder %s25, %s28
      %p34 = scmp.eq.s32.totalorder %s15, 0
      %p35 = por %p33, %p34
      %p36 = scmp.ne.s32.totalorder %s25, %s28
      %p37 = scmp.eq.s32.totalorder %s20, 3
      %p38 = por %p36, %p37
      %p39 = scmp.ne.s32.totalorder %s28, %s29
      %p40 = scmp.eq.s32.totalorder %s20, 0
      %p41 = por %p39, %p40
      %p42 = scmp.ne.s32.totalorder %s28, %s29
      %p43 = scmp.eq.s32.totalorder %s21, 3
      %p44 = por %p42, %p43
      %p46 = scmp.ne.s32.totalorder %s29, %s45
      %p47 = scmp.eq.s32.totalorder %s21, 0
      %p48 = por %p46, %p47
      %s49 = ssub.s32 %s15, %s22
      %p50 = scmp.eq.s32.totalorder %s49, 0
      %s52 = sadd.s32 %s51, 1
      %s53 = scalar_select %p50, %s51, %s52
      %p56 = pneg %p50
      %p57 = scmp.eq.s32.totalorder %s15, 3
      %p58 = por %p56, %p57
      %p59 = scmp.ne.s32.totalorder %s51, %s54
      %p60 = scmp.eq.s32.totalorder %s15, 0
      %p61 = por %p59, %p60
      %p62 = scmp.ne.s32.totalorder %s51, %s54
      %p63 = scmp.eq.s32.totalorder %s20, 3
      %p64 = por %p62, %p63
      %p65 = scmp.ne.s32.totalorder %s54, %s55
      %p66 = scmp.eq.s32.totalorder %s20, 0
      %p67 = por %p65, %p66
      %p68 = scmp.ne.s32.totalorder %s54, %s55
      %p69 = scmp.eq.s32.totalorder %s21, 3
      %p70 = por %p68, %p69
      %p72 = scmp.ne.s32.totalorder %s55, %s71
      %p73 = scmp.eq.s32.totalorder %s21, 0
      %p74 = por %p72, %p73
      %s75 = ssub.s32 %s15, %s22
      %p76 = scmp.eq.s32.totalorder %s75, 0
      %s78 = sadd.s32 %s77, 1
      %s79 = scalar_select %p76, %s77, %s78
      %p82 = pneg %p76
      %p83 = scmp.eq.s32.totalorder %s15, 3
      %p84 = por %p82, %p83
      %p85 = scmp.ne.s32.totalorder %s77, %s80
      %p86 = scmp.eq.s32.totalorder %s15, 0
      %p87 = por %p85, %p86
      %p88 = scmp.ne.s32.totalorder %s77, %s80
      %p89 = scmp.eq.s32.totalorder %s20, 3
      %p90 = por %p88, %p89
      %p91 = scmp.ne.s32.totalorder %s80, %s81
      %p92 = scmp.eq.s32.totalorder %s20, 0
      %p93 = por %p91, %p92
      %p94 = scmp.ne.s32.totalorder %s80, %s81
      %p95 = scmp.eq.s32.totalorder %s21, 3
      %p96 = por %p94, %p95
      %p98 = scmp.ne.s32.totalorder %s81, %s97
      %p99 = scmp.eq.s32.totalorder %s21, 0
      %p100 = por %p98, %p99
      %s101 = ssub.s32 %s15, %s22
      %p102 = scmp.eq.s32.totalorder %s101, 0
      %s104 = sadd.s32 %s103, 1
      %s105 = scalar_select %p102, %s103, %s104
      %p108 = pneg %p102
      %p109 = scmp.eq.s32.totalorder %s15, 3
      %p110 = por %p108, %p109
      %p111 = scmp.ne.s32.totalorder %s103, %s106
      %p112 = scmp.eq.s32.totalorder %s15, 0
      %p113 = por %p111, %p112
      %p114 = scmp.ne.s32.totalorder %s103, %s106
      %p115 = scmp.eq.s32.totalorder %s20, 3
      %p116 = por %p114, %p115
      %p117 = scmp.ne.s32.totalorder %s106, %s107
      %p118 = scmp.eq.s32.totalorder %s20, 0
      %p119 = por %p117, %p118
      %p120 = scmp.ne.s32.totalorder %s106, %s107
      %p121 = scmp.eq.s32.totalorder %s21, 3
      %p122 = por %p120, %p121
      %p124 = scmp.ne.s32.totalorder %s107, %s123
      %p125 = scmp.eq.s32.totalorder %s21, 0
      %p126 = por %p124, %p125
      %p127 = scmp.le.s32.totalorder 1, %s15
      %p128 = scmp.lt.s32.totalorder %s15, 5
      %p129 = pnand %p127, %p128
      %p130 = pneg %p129
      // Predicated region
      $region9: #{tpu_custom_call.1} parent=5 // pred_check
        _
      $region10: #{tpu_custom_call.1} parent=5 // pred_check_branch
        %132 = sbr.rel (%p129) target = $region12
      $region11: #{tpu_custom_call.1} parent=5 // pred_region
        %s133 = ssub.s32 %s15, 1
      $region12: #{tpu_custom_call.1} parent=5 // pred_fallthru
        _
      %p134 = scmp.lt.s32.totalorder %s15, 4
      // Predicated region
      $region13: #{tpu_custom_call.1} parent=5 // pred_check
        %p135 = pneg %p134
      $region14: #{tpu_custom_call.1} parent=5 // pred_check_branch
        %137 = sbr.rel (%p135) target = $region16
      $region15: #{tpu_custom_call.1} parent=5 // pred_region
        // Predicated region
        $region17: #{tpu_custom_call.1} parent=15 // pred_check
          %p138 = pneg %p35
        $region18: #{tpu_custom_call.1} parent=15 // pred_check_branch
          %140 = sbr.rel (%p138) target = $region20
        $region19: #{tpu_custom_call.1} parent=15 // pred_region
          %s141 = sand.u32 %s25, 1
          %s142 = scalar_lea.sflag [#allocation3], %s141
          %s143 = sand.u32 %s25, 1
          %s144 = smul.addr %s143, 32
          %s145 = scalar_lea.vmem [#allocation2], %s144
          %s147 = ssub.s32 512, 512
          %148 = vsyncadd %s142, %s147
          %s149 = smul.addr %s15, 128
          %s150 = scalar_lea.hbm %s0, %s149
          %s151 = sshll.u32 %s145, 4
          %s152 = int_to_ptr.vmem [resolvable:$true] %s151
          %157 = dma.hbm_to_vmem [thread:$0]  %s150, 512, %s152, %s142, 512, 128, 8
        $region20: #{tpu_custom_call.1} parent=15 // pred_fallthru
          _
        // Predicated region
        $region21: #{tpu_custom_call.1} parent=15 // pred_check
          %p158 = pneg %p61
        $region22: #{tpu_custom_call.1} parent=15 // pred_check_branch
          %160 = sbr.rel (%p158) target = $region24
        $region23: #{tpu_custom_call.1} parent=15 // pred_region
          %p161 = scmp.lt.s32.totalorder %s15, 3
          %s162 = scalar_select %p161, %s15, 3
          %s163 = smul.addr %s162, 8
          %s164 = scalar_lea.vmem %s1, %s163
        $region24: #{tpu_custom_call.1} parent=15 // pred_fallthru
          _
        // Predicated region
        $region25: #{tpu_custom_call.1} parent=15 // pred_check
          %p165 = pneg %p87
        $region26: #{tpu_custom_call.1} parent=15 // pred_check_branch
          %167 = sbr.rel (%p165) target = $region28
        $region27: #{tpu_custom_call.1} parent=15 // pred_region
          %p168 = scmp.lt.s32.totalorder %s15, 3
          %s169 = scalar_select %p168, %s15, 3
          %s170 = smul.addr %s169, 8
          %s171 = scalar_lea.vmem %s2, %s170
        $region28: #{tpu_custom_call.1} parent=15 // pred_fallthru
          _
      $region16: #{tpu_custom_call.1} parent=5 // pred_fallthru
        _
      %p172 = scmp.le.s32.totalorder 1, %s15
      %p173 = scmp.lt.s32.totalorder %s15, 5
      %p174 = pnand %p172, %p173
      %p175 = pneg %p174
      // Predicated region
      $region29: #{tpu_custom_call.1} parent=5 // pred_check
        _
      $region30: #{tpu_custom_call.1} parent=5 // pred_check_branch
        %177 = sbr.rel (%p174) target = $region32
      $region31: #{tpu_custom_call.1} parent=5 // pred_region
        %s178 = ssub.s32 %s15, 1
        %s179 = sand.u32 %s28, 1
        %s180 = scalar_lea.sflag [#allocation3], %s179
        %s181 = sand.u32 %s28, 1
        %s182 = smul.addr %s181, 32
        %s183 = scalar_lea.vmem [#allocation2], %s182
        // Predicated region
        $region33: #{tpu_custom_call.1} parent=31 // pred_check
          %p184 = pneg %p41
        $region34: #{tpu_custom_call.1} parent=31 // pred_check_branch
          %186 = sbr.rel (%p184) target = $region36
        $region35: #{tpu_custom_call.1} parent=31 // pred_region
          %187 = dma.done %s180, 512
        $region36: #{tpu_custom_call.1} parent=31 // pred_fallthru
          _
        %s188 = sand.u32 %s28, 1
        %s189 = scalar_lea.sflag [#allocation3], %s188
        %s190 = sand.u32 %s28, 1
        %s191 = smul.addr %s190, 32
        %s192 = scalar_lea.vmem [#allocation2], %s191
        %p193 = pneg %p41
        %p194 = pneg %p38
        %p195 = scmp.lt.s32.totalorder %s20, 3
        %s196 = scalar_select %p195, %s20, 3
        %s197 = smul.addr %s196, 8
        %s198 = scalar_lea.vmem %s1, %s197
        %p199 = pneg %p67
        %p200 = pneg %p64
        %p201 = scmp.lt.s32.totalorder %s20, 3
        %s202 = scalar_select %p201, %s20, 3
        %s203 = smul.addr %s202, 8
        %s204 = scalar_lea.vmem %s2, %s203
        %p205 = pneg %p93
        %p206 = pneg %p90
        %p207 = pneg %p119
        %p208 = pneg %p116
        %s209 = sand.u32 %s106, 1
        %s210 = scalar_lea.sflag [#allocation4], %s209
        %s211 = sand.u32 %s106, 1
        %s212 = smul.addr %s211, 32
        %s213 = scalar_lea.vmem [#allocation5], %s212
        %p214 = scmp.lt.s32.totalorder %s20, 3
        %s215 = scalar_select %p214, %s20, 3
        %s216 = smul.addr %s215, 8
        %s217 = scalar_lea.vmem %s1, %s216
        %p218 = scmp.lt.s32.totalorder %s20, 3
        %s219 = scalar_select %p218, %s20, 3
        %s220 = smul.addr %s219, 8
        %s221 = scalar_lea.vmem %s2, %s220
        %v222 = vld [vmem:[%s183] sm:$0xff]
        %v223 = vld [vmem:[%s183 + $0x8] sm:$0xff]
        %v224 = vld [vmem:[%s183 + $0x10] sm:$0xff]
        %v225 = vld [vmem:[%s183 + $0x18] sm:$0xff]
        %v226 = vadd.f32 %v222, %v223
        %v227 = vadd.f32 %v226, %v224
        %v228 = vadd.f32 %v227, %v225
        %v229 = vmul.f32 %v222, %v222
        %v230 = vmul.f32 %v223, %v223
        %v231 = vmul.f32 %v224, %v224
        %v232 = vmul.f32 %v225, %v225
        %v233 = vadd.f32 %v229, %v230
        %v234 = vadd.f32 %v233, %v231
        %v235 = vadd.f32 %v234, %v232
        %236 = vadd.xlane.f32.xlu0 %v228
        %v237 = vpop.xlane.xlu0 %236
        %238 = vadd.xlane.f32.xlu0 %v235
        %v239 = vpop.xlane.xlu0 %238
        %v240 = vmul.f32 %v237, 0.001953125
        %v241 = vmul.f32 %v239, 0.001953125
        %v242 = vmul.f32 %v240, %v240
        %v243 = vsub.f32 %v241, %v242
        %v244 = vmax.f32 %v243, 0.0
        %v245 = vadd.f32 %v244, 1e-05
        %v246 = vrsqrt.pop %v245
        %v247 = vld [vmem:[%s217] sm:$0xff]
        %v248 = vmul.f32 %v247, %v246
        %v249 = vld [vmem:[%s221] sm:$0xff]
        %v250 = vmul.f32 %v240, %v248
        %v251 = vsub.f32 %v249, %v250
        %253 = vset.pattern.permute.xlu0 0
        %254 = vperm.xlu0 %253, %v248
        %v255 = vpop.permute.xlu0 %254
        %v257 = vmul.f32 %v222, %v255
        %v258 = vmul.f32 %v223, %v255
        %v259 = vmul.f32 %v224, %v255
        %v260 = vmul.f32 %v225, %v255
        %262 = vset.pattern.permute.xlu0 0
        %263 = vperm.xlu0 %262, %v251
        %v264 = vpop.permute.xlu0 %263
        %v266 = vadd.f32 %v257, %v264
        %v267 = vadd.f32 %v258, %v264
        %v268 = vadd.f32 %v259, %v264
        %v269 = vadd.f32 %v260, %v264
        %270 = vst [vmem:[%s213] sm:$0xff] %v266
        %271 = vst [vmem:[%s213 + $0x8] sm:$0xff] %v267
        %272 = vst [vmem:[%s213 + $0x10] sm:$0xff] %v268
        %273 = vst [vmem:[%s213 + $0x18] sm:$0xff] %v269
        %s274 = sand.u32 %s106, 1
        %s275 = scalar_lea.sflag [#allocation4], %s274
        %s276 = sand.u32 %s106, 1
        %s277 = smul.addr %s276, 32
        %s278 = scalar_lea.vmem [#allocation5], %s277
        // Predicated region
        $region37: #{tpu_custom_call.1} parent=31 // pred_check
          %p279 = pneg %p116
        $region38: #{tpu_custom_call.1} parent=31 // pred_check_branch
          %281 = sbr.rel (%p279) target = $region40
        $region39: #{tpu_custom_call.1} parent=31 // pred_region
          %s283 = ssub.s32 512, 512
          %284 = vsyncadd %s275, %s283
          %s285 = smul.addr %s20, 128
          %s286 = scalar_lea.hbm %s3, %s285
          %s287 = sshll.u32 %s278, 4
          %s288 = int_to_ptr.vmem [resolvable:$true] %s287
          %293 = dma.vmem_to_hbm [thread:$0]  %s288, 512, %s286, %s275, 128, 512, 8
        $region40: #{tpu_custom_call.1} parent=31 // pred_fallthru
          _
      $region32: #{tpu_custom_call.1} parent=5 // pred_fallthru
        _
      %p294 = scmp.le.s32.totalorder 2, %s15
      // Predicated region
      $region41: #{tpu_custom_call.1} parent=5 // pred_check
        %p295 = pneg %p294
      $region42: #{tpu_custom_call.1} parent=5 // pred_check_branch
        %297 = sbr.rel (%p295) target = $region44
      $region43: #{tpu_custom_call.1} parent=5 // pred_region
        %s298 = ssub.s32 %s15, 2
        // Predicated region
        $region45: #{tpu_custom_call.1} parent=43 // pred_check
          %p299 = pneg %p122
        $region46: #{tpu_custom_call.1} parent=43 // pred_check_branch
          %301 = sbr.rel (%p299) target = $region48
        $region47: #{tpu_custom_call.1} parent=43 // pred_region
          %s302 = sand.u32 %s107, 1
          %s303 = scalar_lea.sflag [#allocation4], %s302
          %s304 = sand.u32 %s107, 1
          %s305 = smul.addr %s304, 32
          %s306 = scalar_lea.vmem [#allocation5], %s305
          %307 = dma.done %s303, 512
        $region48: #{tpu_custom_call.1} parent=43 // pred_fallthru
          _
      $region44: #{tpu_custom_call.1} parent=5 // pred_fallthru
        _
    $region6: #{tpu_custom_call.1} parent=1 // loop_footer
      %s19 = sadd.s32 1, %s15
    $region7: #{tpu_custom_call.1} parent=1 // loop_footer_branch
      %14 = sbr.rel target = $region3
    $region8: #{tpu_custom_call.1} parent=1 // loop_exit
      _
    %308 = vsyncpa [#allocation3], 1
    %s309 = scalar_lea.sflag [#allocation3], 1
    %310 = vsyncpa %s309, 1
    %311 = vsyncpa [#allocation4], 1
    %s312 = scalar_lea.sflag [#allocation4], 1
    %313 = vsyncpa %s312, 1

</llo_original>
